<compile_context>
chip_gen: v6e
topology: v6e:2x2x1
jax: 0.10.0
libtpu: 0.0.40
codegen_flags: <defaults>
</compile_context>

<pallas_src>
import math
import functools

import jax
import jax.numpy as jnp
from jax import lax
from jax.experimental import pallas as pl
from jax.experimental.pallas import tpu as pltpu


def _round_up(n, m):
    return ((n + m - 1) // m) * m


# ----------------------------- kernels ---------------------------------------

def _eq_linear_kernel_1pass(x_ref, w_ref, *rest, out_gain, activate, has_bias):
    """Single K pass (K_p == TK): no accumulator scratch, no k gating."""
    if has_bias:
        b_ref, o_ref = rest
    else:
        b_ref = None
        (o_ref,) = rest

    # x: [TM, TK] bf16, w: [TN, TK] bf16 (PyTorch layout; contraction over the
    # last dim of both — no transpose materialized anywhere). f32 MXU acc.
    y = lax.dot_general(
        x_ref[...], w_ref[...],
        dimension_numbers=(((1,), (1,)), ((), ())),
        preferred_element_type=jnp.float32,
    )
    y = y * out_gain
    if has_bias:
        y = y + b_ref[...]                      # pre-scaled f32 bias, [1, TN]
    if activate:
        y = jnp.where(y >= 0.0, y, 0.2 * y)     # leaky_relu(0.2)
    o_ref[...] = y.astype(o_ref.dtype)


def _eq_linear_kernel_kloop(x_ref, w_ref, *rest, out_gain, activate, has_bias):
    """Multi K pass: f32 VMEM accumulator with init / epilogue gating."""
    if has_bias:
        b_ref, o_ref, acc_ref = rest
    else:
        b_ref = None
        o_ref, acc_ref = rest

    k = pl.program_id(2)

    @pl.when(k == 0)
    def _():
        acc_ref[...] = jnp.zeros_like(acc_ref)

    acc_ref[...] += lax.dot_general(
        x_ref[...], w_ref[...],
        dimension_numbers=(((1,), (1,)), ((), ())),
        preferred_element_type=jnp.float32,
    )

    @pl.when(k == pl.num_programs(2) - 1)
    def _():
        y = acc_ref[...] * out_gain
        if has_bias:
            y = y + b_ref[...]
        if activate:
            y = jnp.where(y >= 0.0, y, 0.2 * y)
        o_ref[...] = y.astype(o_ref.dtype)


# ----------------------------- wrapper ----------------------------------------

def equalized_linear(x, weight, bias=None, *, lr_multiplier=1.0, activate=False):
    """StyleGAN EqualizedLinear forward.

    x: [batch, in_c]; weight: [out_c, in_c] (PyTorch layout); bias: [out_c] or None.
    """
    batch, in_c = x.shape
    out_c, in_c_w = weight.shape
    assert in_c == in_c_w, "weight/in_channels mismatch"

    weight_gain = lr_multiplier / math.sqrt(in_c)
    bias_gain = lr_multiplier
    post_gain = math.sqrt(2.0) if activate else 1.0
    # Equivalent to scaling after leaky_relu since the gain is > 0 and
    # leaky_relu is positively homogeneous.
    out_gain = weight_gain * post_gain
    has_bias = bias is not None
    out_dtype = x.dtype

    # ---- lane/sublane-dense padding sizes (bf16 streaming => sublane 16) ----
    M_p = _round_up(max(batch, 1), 16)
    K_p = _round_up(in_c, 128)
    N_p = _round_up(out_c, 128)

    # ---- tile selection: weight-resident if it fits a conservative budget ----
    TM0 = min(M_p, 512)

    def workset_bytes(tm, tn, tk, multi_k):
        x_b = tm * tk * 2                       # bf16 x tile
        w_b = tn * tk * 2                       # bf16 weight tile
        o_b = tm * tn * 4                       # output tile (f32 worst case)
        b_b = tn * 4 if has_bias else 0
        acc = tm * tn * 4 if multi_k else 0
        return 2 * (x_b + w_b + o_b + b_b) + acc   # double-buffered pipeline

    VMEM_BUDGET = 12 * 1024 * 1024  # conservative vs 16 MiB v5e scoped default

    candidates = [
        (TM0, N_p, K_p),                                   # weight fully resident
        (min(TM0, 256), N_p, K_p),
        (min(TM0, 128), N_p, K_p),
        (min(TM0, 256), min(N_p, 512), min(K_p, 512)),     # streaming fallback
        (min(TM0, 128), min(N_p, 512), min(K_p, 512)),
        (min(TM0, 128), min(N_p, 256), min(K_p, 512)),     # always fits
    ]
    TM, TN, TK = candidates[-1]
    for tm, tn, tk in candidates:
        if workset_bytes(tm, tn, tk, K_p > tk) <= VMEM_BUDGET:
            TM, TN, TK = tm, tn, tk
            break

    # v7x megacore: guarantee >=2 parallel blocks so the second TC isn't idle.
    # (Only shrinks work per block; no effect on v5e/v6e correctness/perf.)
    m_blocks = _round_up(M_p, TM) // TM
    n_blocks = _round_up(N_p, TN) // TN
    if m_blocks * n_blocks < 2 and TN % 256 == 0:
        TN //= 2

    M_p = _round_up(M_p, TM)
    N_p = _round_up(N_p, TN)
    K_p = _round_up(K_p, TK)

    # ---- pad (zero K-tail is load-bearing for the reduction) + bf16 cast ----
    def pad2(a, rows, cols):
        pr, pc = rows - a.shape[0], cols - a.shape[1]
        if pr or pc:
            a = jnp.pad(a, ((0, pr), (0, pc)))
        return a

    # TODO(synk): for ragged in_c/out_c the wrapper pad is an extra pass over
    # the weight; production StyleGAN dims are 128-aligned so it is a no-op.
    x_p = pad2(x.astype(jnp.bfloat16), M_p, K_p)
    w_p = pad2(weight.astype(jnp.bfloat16), N_p, K_p)

    multi_k = (K_p // TK) > 1

    if multi_k:
        grid = (M_p // TM, N_p // TN, K_p // TK)
        x_spec = pl.BlockSpec((TM, TK), lambda i, j, k: (i, k))
        w_spec = pl.BlockSpec((TN, TK), lambda i, j, k: (j, k))
        b_spec = pl.BlockSpec((1, TN), lambda i, j, k: (0, j))
        o_spec = pl.BlockSpec((TM, TN), lambda i, j, k: (i, j))
        scratch = [pltpu.VMEM((TM, TN), jnp.float32)]
        semantics = ("parallel", "parallel", "arbitrary")
        kernel = functools.partial(
            _eq_linear_kernel_kloop,
            out_gain=out_gain, activate=activate, has_bias=has_bias)
    else:
        grid = (M_p // TM, N_p // TN)
        x_spec = pl.BlockSpec((TM, TK), lambda i, j: (i, 0))
        # When TN == N_p this index map is constant -> weight read from HBM once.
        w_spec = pl.BlockSpec((TN, TK), lambda i, j: (j, 0))
        b_spec = pl.BlockSpec((1, TN), lambda i, j: (0, j))
        o_spec = pl.BlockSpec((TM, TN), lambda i, j: (i, j))
        scratch = []
        semantics = ("parallel", "parallel")
        kernel = functools.partial(
            _eq_linear_kernel_1pass,
            out_gain=out_gain, activate=activate, has_bias=has_bias)

    in_specs = [x_spec, w_spec]
    args = [x_p, w_p]
    if has_bias:
        # Fold bias_gain (and sqrt(2)) into a pre-scaled f32 bias row. Block
        # index only changes with j, so it is not re-DMA'd on consecutive steps.
        b_p = jnp.zeros((1, N_p), jnp.float32).at[0, :out_c].set(
            bias.astype(jnp.float32) * (bias_gain * post_gain))
        in_specs.append(b_spec)
        args.append(b_p)

    out_p = pl.pallas_call(
        kernel,
        out_shape=jax.ShapeDtypeStruct((M_p, N_p), out_dtype),
        grid=grid,
        in_specs=in_specs,
        out_specs=o_spec,
        scratch_shapes=scratch,
        compiler_params=pltpu.CompilerParams(dimension_semantics=semantics),
    )(*args)

    return out_p[:batch, :out_c]


# ----------------------------- reference & test -------------------------------

def _reference(x, weight, bias, *, lr_multiplier, activate):
    w_eff = weight * (lr_multiplier / math.sqrt(weight.shape[1]))
    y = x @ w_eff.T
    if bias is not None:
        y = y + bias * lr_multiplier
    if activate:
        y = y * math.sqrt(2.0)
        y = jnp.where(y >= 0.0, y, 0.2 * y)
    return y


if __name__ == "__main__":
    key = jax.random.PRNGKey(0)
    k_x, k_w = jax.random.split(key, 2)

    batch, in_c, out_c = 8, 32, 64
    lr_multiplier = 0.01

    # Parameters matching the nn.Module __init__:
    #   weight ~ randn([out_c, in_c]) / lr_multiplier,  bias = ones (init_bias_one)
    x = jax.random.normal(k_x, (batch, in_c), dtype=jnp.float32)
    weight = jax.random.normal(k_w, (out_c, in_c), dtype=jnp.float32) / lr_multiplier
    bias = jnp.ones((out_c,), dtype=jnp.float32)

    # References: one with bf16-rounded inputs (what a bf16-streaming kernel
    # computes, tight tolerance) and one in full f32 (loose tolerance).
    xq = x.astype(jnp.bfloat16).astype(jnp.float32)
    wq = weight.astype(jnp.bfloat16).astype(jnp.float32)

    # Case 1: bias + activation (mapping-network style).
    y1 = equalized_linear(x, weight, bias, lr_multiplier=lr_multiplier, activate=True)
    jax.block_until_ready(y1)
    ref1 = _reference(xq, wq, bias, lr_multiplier=lr_multiplier, activate=True)
    assert jnp.allclose(y1, ref1, atol=2e-3, rtol=2e-3), "mismatch (bias+activate)"
    ref1_f32 = _reference(x, weight, bias, lr_multiplier=lr_multiplier, activate=True)
    assert jnp.allclose(y1, ref1_f32, atol=5e-2, rtol=5e-2), "mismatch vs f32 ref"

    # Case 2: no bias, no activation (static branch skips bias DMA/add).
    y2 = equalized_linear(x, weight, None, lr_multiplier=lr_multiplier, activate=False)
    jax.block_until_ready(y2)
    ref2 = _reference(xq, wq, None, lr_multiplier=lr_multiplier, activate=False)
    assert jnp.allclose(y2, ref2, atol=2e-3, rtol=2e-3), "mismatch (no-bias)"

    print("KERNEL_OK")
</pallas_src>

<mosaic_0001>
module attributes {stable_mosaic.version = 11 : i64} {
  func.func @_eq_linear_kernel_1pass(%arg0: i32, %arg1: i32, %arg2: memref<16x128xbf16, #tpu.memory_space<vmem>>, %arg3: memref<128x128xbf16, #tpu.memory_space<vmem>>, %arg4: memref<1x128xf32, #tpu.memory_space<vmem>>, %arg5: memref<16x128xf32, #tpu.memory_space<vmem>>) attributes {dimension_semantics = [#tpu.dimension_semantics<parallel>, #tpu.dimension_semantics<parallel>], iteration_bounds = array<i64: 1, 1>, scalar_prefetch = 0 : i64, scratch_operands = 0 : i64, tpu.core_type = #tpu.core_type<tc>, window_params = [{transform_indices = @transform_0, window_bounds = array<i64: 16, 128>}, {transform_indices = @transform_1, window_bounds = array<i64: 128, 128>}, {transform_indices = @transform_2, window_bounds = array<i64: 1, 128>}, {transform_indices = @transform_3, window_bounds = array<i64: 16, 128>}]} {
    %c0 = arith.constant 0 : index
    %c0_0 = arith.constant 0 : index
    %0 = vector.load %arg2[%c0, %c0_0] : memref<16x128xbf16, #tpu.memory_space<vmem>>, vector<16x128xbf16>
    %c0_1 = arith.constant 0 : index
    %c0_2 = arith.constant 0 : index
    %1 = vector.load %arg3[%c0_1, %c0_2] : memref<128x128xbf16, #tpu.memory_space<vmem>>, vector<128x128xbf16>
    %cst = arith.constant dense<0.000000e+00> : vector<16x128xf32>
    %2 = tpu.matmul %0, %1, %cst {dimension_numbers = #tpu.dot_dimension_numbers<[1], [1], [0], [0], [0, 0, 1, 0], [], []>} : vector<16x128xbf16>, vector<128x128xbf16>, vector<16x128xf32> -> vector<16x128xf32>
    %cst_3 = arith.constant 2.500000e-03 : f32
    %3 = vector.broadcast %cst_3 : f32 to vector<16x128xf32>
    %4 = arith.mulf %2, %3 : vector<16x128xf32>
    %c0_4 = arith.constant 0 : index
    %c0_5 = arith.constant 0 : index
    %5 = vector.load %arg4[%c0_4, %c0_5] : memref<1x128xf32, #tpu.memory_space<vmem>>, vector<1x128xf32>
    %6 = vector.broadcast %5 : vector<1x128xf32> to vector<16x128xf32>
    %7 = arith.addf %4, %6 : vector<16x128xf32>
    %cst_6 = arith.constant 0.000000e+00 : f32
    %8 = vector.broadcast %cst_6 : f32 to vector<16x128xf32>
    %9 = arith.cmpf oge, %7, %8 : vector<16x128xf32>
    %cst_7 = arith.constant 2.000000e-01 : f32
    %10 = vector.broadcast %cst_7 : f32 to vector<16x128xf32>
    %11 = arith.mulf %10, %7 : vector<16x128xf32>
    %12 = arith.select %9, %7, %11 : vector<16x128xi1>, vector<16x128xf32>
    %c0_8 = arith.constant 0 : index
    %c0_9 = arith.constant 0 : index
    %13 = vector.load %arg5[%c0_8, %c0_9] : memref<16x128xf32, #tpu.memory_space<vmem>>, vector<16x128xf32>
    tpu.vector_store %arg5[%c0_8, %c0_9], %12 {strides = array<i32>} : memref<16x128xf32, #tpu.memory_space<vmem>>, vector<16x128xf32>,
    return
  }
  func.func @transform_0(%arg0: i32, %arg1: i32) -> (i32, i32) {
    %c0_i32 = arith.constant 0 : i32
    %c0_i32_0 = arith.constant 0 : i32
    return %arg0, %c0_i32 : i32, i32
  }
  func.func @transform_1(%arg0: i32, %arg1: i32) -> (i32, i32) {
    %c0_i32 = arith.constant 0 : i32
    %c0_i32_0 = arith.constant 0 : i32
    return %arg1, %c0_i32 : i32, i32
  }
  func.func @transform_2(%arg0: i32, %arg1: i32) -> (i32, i32) {
    %c0_i32 = arith.constant 0 : i32
    %c0_i32_0 = arith.constant 0 : i32
    return %c0_i32, %arg1 : i32, i32
  }
  func.func @transform_3(%arg0: i32, %arg1: i32) -> (i32, i32) {
    %c0_i32 = arith.constant 0 : i32
    return %arg0, %arg1 : i32, i32
  }
}

</mosaic_0001>

<llo_original>
// kernel: tpu_custom_call.1
$region0: #{tpu_custom_call.1}
  #allocation0 [shape = 'u32[]', space=smem, size = 0x4, offset = 0x4, fixed_abs, tag = 'smem constant byte address 0x4 - core index']
  #allocation1 [shape = 'u32[144,128]{1,0:T(1,128)}', space=vmem, size = 0x12000, scoped, tag = 'internal scratch']
  %s0 = inlined_call_operand.hbm [shape: bf16[16,128], index: 0, kind: input, shape index: {}]
  %s1 = inlined_call_operand.hbm [shape: bf16[128,128], index: 1, kind: input, shape index: {}]
  %s2 = inlined_call_operand.vmem [shape: f32[1,128], index: 2, kind: input, shape index: {}]
  %s3 = inlined_call_operand.hbm [shape: f32[16,128], index: 3, kind: output, shape index: {}]
  %s4 = sld [smem:[#allocation0]]
  $region30: #{tpu_custom_call.1} parent=0
    _
  %s6 = ssub.s32 1, %s4
  %s7 = scalar_select 0, %s6, %s4
  $region1: #{tpu_custom_call.1} parent=0
    #allocation2 [shape = 'u8[4096]{0}', space=vmem, size = 0x1000, scoped, tag = 'input window, operand 0, single buffered']
    #allocation3 [shape = 's32[1]{0}', space=sflag, size = 0x4, scoped, tag = 'scoped memory for tpu_custom_call.1']
    #allocation4 [shape = 's32[1]{0}', space=sflag, size = 0x4, scoped, tag = 'scoped memory for tpu_custom_call.1']
    #allocation5 [shape = 'u8[32768]{0}', space=vmem, size = 0x8000, scoped, tag = 'input window, operand 1, single buffered']
    #allocation6 [shape = 's32[1]{0}', space=sflag, size = 0x4, scoped, tag = 'scoped memory for tpu_custom_call.1']
    #allocation7 [shape = 'u8[8192]{0}', space=vmem, size = 0x2000, scoped, tag = 'output window, operand 0, single buffered']
    %8 = vsyncpa [#allocation3], 0
    %9 = vsyncpa [#allocation6], 0
    %10 = vsyncpa [#allocation4], 0
    // Predicated region
    $region2: #{tpu_custom_call.1} parent=1 // pred_check
      _
    $region3: #{tpu_custom_call.1} parent=1 // pred_check_branch
      %12 = sbr.rel (0) target = $region5
    $region4: #{tpu_custom_call.1} parent=1 // pred_region
      %s14 = ssub.s32 128, 128
      %15 = vsyncadd [#allocation3], %s14
      %s16 = sshll.u32 [#allocation2], 4
      %s17 = int_to_ptr.vmem [resolvable:$true] %s16
      %22 = dma.hbm_to_vmem [thread:$0]  %s0, 128, %s17, [#allocation3], 64, 64, 4
    $region5: #{tpu_custom_call.1} parent=1 // pred_fallthru
      _
    // Predicated region
    $region6: #{tpu_custom_call.1} parent=1 // pred_check
      _
    $region7: #{tpu_custom_call.1} parent=1 // pred_check_branch
      %24 = sbr.rel (0) target = $region9
    $region8: #{tpu_custom_call.1} parent=1 // pred_region
      %s26 = ssub.s32 1024, 1024
      %27 = vsyncadd [#allocation6], %s26
      %s28 = sshll.u32 [#allocation5], 4
      %s29 = int_to_ptr.vmem [resolvable:$true] %s28
      %34 = dma.hbm_to_vmem [thread:$0]  %s1, 1024, %s29, [#allocation6], 64, 64, 4
    $region9: #{tpu_custom_call.1} parent=1 // pred_fallthru
      _
    // Predicated region
    $region10: #{tpu_custom_call.1} parent=1 // pred_check
      _
    $region11: #{tpu_custom_call.1} parent=1 // pred_check_branch
      %36 = sbr.rel (0) target = $region13
    $region12: #{tpu_custom_call.1} parent=1 // pred_region
      _
    $region13: #{tpu_custom_call.1} parent=1 // pred_fallthru
      _
    // Predicated region
    $region14: #{tpu_custom_call.1} parent=1 // pred_check
      _
    $region15: #{tpu_custom_call.1} parent=1 // pred_check_branch
      %38 = sbr.rel (0) target = $region17
    $region16: #{tpu_custom_call.1} parent=1 // pred_region
      %39 = dma.done [#allocation3], 128
    $region17: #{tpu_custom_call.1} parent=1 // pred_fallthru
      _
    // Predicated region
    $region18: #{tpu_custom_call.1} parent=1 // pred_check
      _
    $region19: #{tpu_custom_call.1} parent=1 // pred_check_branch
      %41 = sbr.rel (0) target = $region21
    $region20: #{tpu_custom_call.1} parent=1 // pred_region
      %42 = dma.done [#allocation6], 1024
    $region21: #{tpu_custom_call.1} parent=1 // pred_fallthru
      _
    %v44 = vld [vmem:[#allocation2] sm:$0xf]
    %v45 = vld [vmem:[#allocation2 + $0x4] sm:$0xf]
    %v46 = vld [vmem:[#allocation5] sm:$0xf]
    %v47 = vld [vmem:[#allocation5 + $0x4] sm:$0xf]
    %v48 = vld [vmem:[#allocation5 + $0x8] sm:$0xf]
    %v49 = vld [vmem:[#allocation5 + $0xc] sm:$0xf]
    %v50 = vld [vmem:[#allocation5 + $0x10] sm:$0xf]
    %v51 = vld [vmem:[#allocation5 + $0x14] sm:$0xf]
    %v52 = vld [vmem:[#allocation5 + $0x18] sm:$0xf]
    %v53 = vld [vmem:[#allocation5 + $0x1c] sm:$0xf]
    %v54 = vld [vmem:[#allocation5 + $0x20] sm:$0xf]
    %v55 = vld [vmem:[#allocation5 + $0x24] sm:$0xf]
    %v56 = vld [vmem:[#allocation5 + $0x28] sm:$0xf]
    %v57 = vld [vmem:[#allocation5 + $0x2c] sm:$0xf]
    %v58 = vld [vmem:[#allocation5 + $0x30] sm:$0xf]
    %v59 = vld [vmem:[#allocation5 + $0x34] sm:$0xf]
    %v60 = vld [vmem:[#allocation5 + $0x38] sm:$0xf]
    %v61 = vld [vmem:[#allocation5 + $0x3c] sm:$0xf]
    %v64 = vunpack.c.l.b16 %v44
    %v65 = vunpack.c.l.b16 %v45
    %v66 = vpack.c.b16 %v65, %v64
    %v84 = vunpack.c.l.b16 %v46
    %v85 = vunpack.c.l.b16 %v47
    %v86 = vunpack.c.l.b16 %v48
    %v87 = vunpack.c.l.b16 %v49
    %v88 = vunpack.c.l.b16 %v50
    %v89 = vunpack.c.l.b16 %v51
    %v90 = vunpack.c.l.b16 %v52
    %v91 = vunpack.c.l.b16 %v53
    %v92 = vunpack.c.l.b16 %v54
    %v93 = vunpack.c.l.b16 %v55
    %v94 = vunpack.c.l.b16 %v56
    %v95 = vunpack.c.l.b16 %v57
    %v96 = vunpack.c.l.b16 %v58
    %v97 = vunpack.c.l.b16 %v59
    %v98 = vunpack.c.l.b16 %v60
    %v99 = vunpack.c.l.b16 %v61
    %v100 = vpack.c.b16 %v85, %v84
    %v101 = vpack.c.b16 %v87, %v86
    %v102 = vpack.c.b16 %v89, %v88
    %v103 = vpack.c.b16 %v91, %v90
    %v104 = vpack.c.b16 %v93, %v92
    %v105 = vpack.c.b16 %v95, %v94
    %v106 = vpack.c.b16 %v97, %v96
    %v107 = vpack.c.b16 %v99, %v98
    %116 = vmatprep.subr.bf16.mxu0 0
    %117 = vmatpush1.bf16.xpose.msra.mxu0 %v107
    %118 = vmatprep.subr.bf16.mxu0 0
    %119 = vmatpush1.bf16.xpose.msra.mxu0 %v106
    %120 = vmatprep.subr.bf16.mxu0 0
    %121 = vmatpush1.bf16.xpose.msra.mxu0 %v105
    %122 = vmatprep.subr.bf16.mxu0 0
    %123 = vmatpush1.bf16.xpose.msra.mxu0 %v104
    %124 = vmatprep.subr.bf16.mxu0 0
    %125 = vmatpush1.bf16.xpose.msra.mxu0 %v103
    %126 = vmatprep.subr.bf16.mxu0 0
    %127 = vmatpush1.bf16.xpose.msra.mxu0 %v102
    %128 = vmatprep.subr.bf16.mxu0 0
    %129 = vmatpush1.bf16.xpose.msra.mxu0 %v101
    %130 = vmatprep.subr.bf16.mxu0 0
    %131 = vmatpush1.bf16.xpose.msra.mxu0 %v100
    %132 = vmatprep.subr.bf16.mxu0 0
    %133 = vmatpush2.bf16.xpose.msra.mxu0 0
    %134 = vmatprep.subr.bf16.mxu0 0
    %135 = vmatpush2.bf16.xpose.msra.mxu0 0
    %136 = vmatprep.subr.bf16.mxu0 0
    %137 = vmatpush2.bf16.xpose.msra.mxu0 0
    %138 = vmatprep.subr.bf16.mxu0 0
    %139 = vmatpush2.bf16.xpose.msra.mxu0 0
    %140 = vmatprep.subr.bf16.mxu0 0
    %141 = vmatpush2.bf16.xpose.msra.mxu0 0
    %142 = vmatprep.subr.bf16.mxu0 0
    %143 = vmatpush2.bf16.xpose.msra.mxu0 0
    %144 = vmatprep.subr.bf16.mxu0 0
    %145 = vmatpush2.bf16.xpose.msra.mxu0 0
    %146 = vmatprep.subr.bf16.mxu0 0
    %147 = vmatpush2.bf16.xpose.msra.mxu0 0
    %148 = vmatprep.mubr.bf16.mxu0 0
    %149 = vmatmul.mubr.bf16.gmra.mxu0 %v66
    %v150 = vpop.f32.mrf.mxu0
    %v151 = vadd.f32 0.0, %v150
    %v152 = vpop.f32.mrf.mxu0
    %v153 = vpop.f32.mrf.mxu0
    %v154 = vadd.f32 0.0, %v153
    %v155 = vpop.f32.mrf.mxu0
    %156 = vdwg.mxu0
    %v157 = vmul.f32 %v151, 0.0025
    %v158 = vmul.f32 %v154, 0.0025
    %v159 = vld [vmem:[%s2] sm:$0x1]
    %v161 = vlaneseq
    %v162 = vshrl.u32 %v161, 7
    %v163 = vsub.s32 0, %v162
    %v164 = vrot.slane %v159, %v163
    %v166 = vadd.f32 %v157, %v164
    %v167 = vadd.f32 %v158, %v164
    %vm168 = vcmp.ge.f32.partialorder %v166, 0.0
    %vm169 = vcmp.ge.f32.partialorder %v167, 0.0
    %v170 = vmul.f32 %v166, 0.2
    %v171 = vmul.f32 %v167, 0.2
    %v172 = vsel %vm168, %v166, %v170
    %v173 = vsel %vm169, %v167, %v171
    %174 = vst [vmem:[#allocation7] sm:$0xff] %v172
    %175 = vst [vmem:[#allocation7 + $0x8] sm:$0xff] %v173
    // Predicated region
    $region22: #{tpu_custom_call.1} parent=1 // pred_check
      _
    $region23: #{tpu_custom_call.1} parent=1 // pred_check_branch
      %177 = sbr.rel (0) target = $region25
    $region24: #{tpu_custom_call.1} parent=1 // pred_region
      %s179 = ssub.s32 256, 256
      %180 = vsyncadd [#allocation4], %s179
      %s181 = sshll.u32 [#allocation7], 4
      %s182 = int_to_ptr.vmem [resolvable:$true] %s181
      %187 = dma.vmem_to_hbm [thread:$0]  %s182, 256, %s3, [#allocation4], 128, 128, 8
    $region25: #{tpu_custom_call.1} parent=1 // pred_fallthru
      _
    // Predicated region
    $region26: #{tpu_custom_call.1} parent=1 // pred_check
      _
    $region27: #{tpu_custom_call.1} parent=1 // pred_check_branch
      %189 = sbr.rel (0) target = $region29
    $region28: #{tpu_custom_call.1} parent=1 // pred_region
      %190 = dma.done [#allocation4], 256
    $region29: #{tpu_custom_call.1} parent=1 // pred_fallthru
      _
    %191 = vsyncpa [#allocation3], 1
    %192 = vsyncpa [#allocation6], 1
    %193 = vsyncpa [#allocation4], 1

</llo_original>
